<compile_context>
chip_gen: v7x
topology: tpu7x:2x2x1
jax: 0.10.0
libtpu: 0.0.40
codegen_flags: <defaults>
</compile_context>

<pallas_src>
import functools

import jax
import jax.numpy as jnp
from jax.experimental import pallas as pl
from jax.experimental.pallas import tpu as pltpu

LANE = 128     # lane width: padding granularity for feature (last) dims
SUBLANE = 8    # f32 sublane granularity: padding granularity for the batch dim
NEG_BIG = -1e30


def _round_up(x, m):
    return (x + m - 1) // m * m


def mlp4_kernel(x_ref, w1_ref, b1_ref, w2_ref, b2_ref, w3_ref, b3_ref, o_ref):
    """Whole forward pass for one batch tile; all operands resident in VMEM.

    x_ref is f32; MXU operands are cast to the (bf16) weight dtype in-kernel.
    Bias add / ReLU / log_softmax stay in f32 on the VPU/EUP (v5e-friendly).
    Padded class lanes are masked for free via b3's -1e30 padding.
    """
    mxu_dtype = w1_ref.dtype
    x = x_ref[...].astype(mxu_dtype)

    # fc1 + ReLU  (bf16 MXU operands, f32 accumulation, f32 elementwise)
    h1 = jnp.dot(x, w1_ref[...], preferred_element_type=jnp.float32) + b1_ref[...]
    h1 = jnp.maximum(h1, 0.0)

    # fc2 + ReLU  (hidden dim zero-padded to 128 lanes; padded lanes stay exactly 0)
    h2 = jnp.dot(h1.astype(mxu_dtype), w2_ref[...],
                 preferred_element_type=jnp.float32) + b2_ref[...]
    h2 = jnp.maximum(h2, 0.0)

    # fc3  (output dim padded to 128 lanes; padded w3 cols are 0 and padded b3 lanes are
    # -1e30, so padded logits are -1e30 -> they never win the max and exp underflows to 0)
    logits = jnp.dot(h2.astype(mxu_dtype), w3_ref[...],
                     preferred_element_type=jnp.float32) + b3_ref[...]

    # Numerically stable log_softmax over dim=1 (all f32), lane-dense store.
    m = jnp.max(logits, axis=-1, keepdims=True)
    shifted = logits - m
    lse = jnp.log(jnp.sum(jnp.exp(shifted), axis=-1, keepdims=True))
    o_ref[...] = (shifted - lse).astype(o_ref.dtype)


def prepare_params(w1, b1, w2, b2, w3, b3, mxu_dtype=jnp.bfloat16):
    """One-time padding/casting of the weights (hoisted out of the jitted forward).

    Weights -> lane-dense padded widths, cast to the MXU dtype.
    Biases stay f32; b3's padded lanes carry -1e30 so the softmax mask is free.
    """
    h1 = w1.shape[1]
    h2 = w2.shape[1]
    d_out = w3.shape[1]

    h1_p = _round_up(h1, LANE)        # 256 -> 256
    h2_p = _round_up(h2, LANE)        # 32  -> 128
    d_out_p = _round_up(d_out, LANE)  # 10  -> 128

    f32 = jnp.float32
    w1c = jnp.pad(w1, ((0, 0), (0, h1_p - h1))).astype(mxu_dtype)
    b1c = jnp.pad(b1, ((0, 0), (0, h1_p - h1))).astype(f32)
    w2c = jnp.pad(w2, ((0, h1_p - h1), (0, h2_p - h2))).astype(mxu_dtype)
    b2c = jnp.pad(b2, ((0, 0), (0, h2_p - h2))).astype(f32)
    w3c = jnp.pad(w3, ((0, h2_p - h2), (0, d_out_p - d_out))).astype(mxu_dtype)
    b3c = jnp.pad(b3, ((0, 0), (0, d_out_p - d_out)),
                  constant_values=NEG_BIG).astype(f32)
    return (w1c, b1c, w2c, b2c, w3c, b3c)


@functools.partial(jax.jit, static_argnames=("tile_b", "out_dtype"))
def mlp4_forward_padded(x, w1c, b1c, w2c, b2c, w3c, b3c, *,
                        tile_b=1024, out_dtype=jnp.bfloat16):
    """Runs the fused MLP4 forward.  Returns the PADDED (pB, d_out_p) log-prob buffer;
    slice rows/lanes lazily at the consumer (avoids a compaction copy of the whole
    output right after a writeback-bound kernel)."""
    B, d_in = x.shape
    h1_p = w1c.shape[1]
    h2_p = w2c.shape[1]
    d_out_p = w3c.shape[1]

    # Pad the batch to the sublane granularity, then pick a tile:
    #   * as large as possible (fewer grid steps -> less per-step overhead),
    #   * but <= ceil(pB/2) so there are always >=2 "parallel" steps (both TCs on v7x).
    pB = _round_up(B, SUBLANE)
    half = _round_up(-(-pB // 2), SUBLANE)
    tb = max(SUBLANE, min(tile_b, half))
    pB = _round_up(pB, tb)
    grid = (pB // tb,)

    xp = x if pB == B else jnp.pad(x, ((0, pB - B), (0, 0)))  # stays f32

    # Grid-invariant blocks (constant index_map) are not re-fetched between consecutive
    # grid steps, so only the x/out tiles move per step.  Total weight footprint is a
    # few hundred KB, far under the explicit 32 MiB VMEM budget.
    out = pl.pallas_call(
        mlp4_kernel,
        out_shape=jax.ShapeDtypeStruct((pB, d_out_p), out_dtype),
        grid_spec=pltpu.PrefetchScalarGridSpec(
            num_scalar_prefetch=0,
            grid=grid,
            in_specs=[
                pl.BlockSpec((tb, d_in), lambda i: (i, 0)),       # x tile (f32)
                pl.BlockSpec((d_in, h1_p), lambda i: (0, 0)),     # w1 (bf16)
                pl.BlockSpec((1, h1_p), lambda i: (0, 0)),        # b1 (f32)
                pl.BlockSpec((h1_p, h2_p), lambda i: (0, 0)),     # w2 (bf16)
                pl.BlockSpec((1, h2_p), lambda i: (0, 0)),        # b2 (f32)
                pl.BlockSpec((h2_p, d_out_p), lambda i: (0, 0)),  # w3 (bf16)
                pl.BlockSpec((1, d_out_p), lambda i: (0, 0)),     # b3 (f32, -1e30 pad)
            ],
            out_specs=pl.BlockSpec((tb, d_out_p), lambda i: (i, 0)),
        ),
        compiler_params=pltpu.CompilerParams(
            dimension_semantics=("parallel",),        # >=2 steps => both TCs on v7x
            vmem_limit_bytes=32 * 1024 * 1024,
        ),
    )(xp, w1c, b1c, w2c, b2c, w3c, b3c)

    return out   # padded; consumer slices [:B, :d_out] lazily if it needs compaction


def init_params(key, input_size, output_size):
    """Deterministic init mimicking nn.Linear default (uniform +/- 1/sqrt(fan_in))."""
    dims = [(input_size, 256), (256, 32), (32, output_size)]
    params = []
    for fan_in, fan_out in dims:
        key, kw, kb = jax.random.split(key, 3)
        bound = 1.0 / jnp.sqrt(fan_in)
        w = jax.random.uniform(kw, (fan_in, fan_out), jnp.float32, -bound, bound)
        b = jax.random.uniform(kb, (1, fan_out), jnp.float32, -bound, bound)
        params += [w, b]
    return params


def reference_forward(x, w1, b1, w2, b2, w3, b3, mxu_dtype=jnp.float32):
    """Pure-JAX reference; mxu_dtype=bf16 mirrors the kernel's MXU operand cast."""
    dot = lambda a, b: jnp.dot(a.astype(mxu_dtype), b.astype(mxu_dtype),
                               preferred_element_type=jnp.float32)
    h1 = jnp.maximum(dot(x, w1) + b1, 0.0)
    h2 = jnp.maximum(dot(h1, w2) + b2, 0.0)
    logits = dot(h2, w3) + b3
    return jax.nn.log_softmax(logits, axis=1)


if __name__ == "__main__":
    key = jax.random.PRNGKey(0)
    B, input_size, output_size = 256, 64, 10   # 2 parallel grid steps

    key, kx = jax.random.split(key)
    x = jax.random.normal(kx, (B, input_size), jnp.float32)

    w1, b1, w2, b2, w3, b3 = init_params(key, input_size, output_size)

    # One-time weight prep (padding + bf16 cast), outside the jitted forward.
    padded = prepare_params(w1, b1, w2, b2, w3, b3)

    out_padded = mlp4_forward_padded(x, *padded)
    out_padded = jax.block_until_ready(out_padded)

    # Lazy slice only where the compact result is actually consumed (here: the check).
    out = out_padded[:B, :output_size].astype(jnp.float32)
    assert out.shape == (B, output_size)

    # Check vs. a reference using the same bf16 MXU operands / f32 accumulation
    # (tolerance covers the bf16 output rounding).
    ref_bf16 = reference_forward(x, w1, b1, w2, b2, w3, b3, mxu_dtype=jnp.bfloat16)
    assert jnp.allclose(out, ref_bf16, atol=5e-2, rtol=5e-2)

    # Loose check vs. the pure-f32 PyTorch-equivalent forward (only bf16 rounding differs).
    ref_f32 = reference_forward(x, w1, b1, w2, b2, w3, b3, mxu_dtype=jnp.float32)
    assert jnp.allclose(out, ref_f32, atol=2e-1, rtol=2e-1)

    print("KERNEL_OK")
</pallas_src>

<mosaic_0001>
module attributes {stable_mosaic.version = 11 : i64} {
  func.func @mlp4_kernel(%arg0: i32, %arg1: memref<128x64xf32, #tpu.memory_space<vmem>>, %arg2: memref<64x256xbf16, #tpu.memory_space<vmem>>, %arg3: memref<1x256xf32, #tpu.memory_space<vmem>>, %arg4: memref<256x128xbf16, #tpu.memory_space<vmem>>, %arg5: memref<1x128xf32, #tpu.memory_space<vmem>>, %arg6: memref<128x128xbf16, #tpu.memory_space<vmem>>, %arg7: memref<1x128xf32, #tpu.memory_space<vmem>>, %arg8: memref<128x128xbf16, #tpu.memory_space<vmem>>) attributes {dimension_semantics = [#tpu.dimension_semantics<parallel>], iteration_bounds = array<i64: 2>, scalar_prefetch = 0 : i64, scratch_operands = 0 : i64, tpu.core_type = #tpu.core_type<tc>, window_params = [{transform_indices = @transform_0, window_bounds = array<i64: 128, 64>}, {pipeline_mode = #tpu.pipeline_mode<synchronous>, transform_indices = @transform_1, window_bounds = array<i64: 64, 256>}, {pipeline_mode = #tpu.pipeline_mode<synchronous>, transform_indices = @transform_2, window_bounds = array<i64: 1, 256>}, {pipeline_mode = #tpu.pipeline_mode<synchronous>, transform_indices = @transform_3, window_bounds = array<i64: 256, 128>}, {pipeline_mode = #tpu.pipeline_mode<synchronous>, transform_indices = @transform_4, window_bounds = array<i64: 1, 128>}, {pipeline_mode = #tpu.pipeline_mode<synchronous>, transform_indices = @transform_5, window_bounds = array<i64: 128, 128>}, {pipeline_mode = #tpu.pipeline_mode<synchronous>, transform_indices = @transform_6, window_bounds = array<i64: 1, 128>}, {transform_indices = @transform_7, window_bounds = array<i64: 128, 128>}]} {
    %c0 = arith.constant 0 : index
    %c0_0 = arith.constant 0 : index
    %0 = vector.load %arg1[%c0, %c0_0] : memref<128x64xf32, #tpu.memory_space<vmem>>, vector<128x64xf32>
    %1 = arith.truncf %0 : vector<128x64xf32> to vector<128x64xbf16>
    %c0_1 = arith.constant 0 : index
    %c0_2 = arith.constant 0 : index
    %2 = vector.load %arg2[%c0_1, %c0_2] : memref<64x256xbf16, #tpu.memory_space<vmem>>, vector<64x256xbf16>
    %cst = arith.constant dense<0.000000e+00> : vector<128x256xf32>
    %3 = tpu.matmul %1, %2, %cst {dimension_numbers = #tpu.dot_dimension_numbers<[1], [0], [0], [1], [0, 0, 1, 1], [], []>} : vector<128x64xbf16>, vector<64x256xbf16>, vector<128x256xf32> -> vector<128x256xf32>
    %c0_3 = arith.constant 0 : index
    %c0_4 = arith.constant 0 : index
    %4 = vector.load %arg3[%c0_3, %c0_4] : memref<1x256xf32, #tpu.memory_space<vmem>>, vector<1x256xf32>
    %5 = vector.broadcast %4 : vector<1x256xf32> to vector<128x256xf32>
    %6 = arith.addf %3, %5 : vector<128x256xf32>
    %cst_5 = arith.constant 0.000000e+00 : f32
    %7 = vector.broadcast %cst_5 : f32 to vector<128x256xf32>
    %8 = arith.maximumf %6, %7 : vector<128x256xf32>
    %9 = arith.truncf %8 : vector<128x256xf32> to vector<128x256xbf16>
    %c0_6 = arith.constant 0 : index
    %c0_7 = arith.constant 0 : index
    %10 = vector.load %arg4[%c0_6, %c0_7] : memref<256x128xbf16, #tpu.memory_space<vmem>>, vector<256x128xbf16>
    %cst_8 = arith.constant dense<0.000000e+00> : vector<128x128xf32>
    %11 = tpu.matmul %9, %10, %cst_8 {dimension_numbers = #tpu.dot_dimension_numbers<[1], [0], [0], [1], [0, 0, 1, 1], [], []>} : vector<128x256xbf16>, vector<256x128xbf16>, vector<128x128xf32> -> vector<128x128xf32>
    %c0_9 = arith.constant 0 : index
    %c0_10 = arith.constant 0 : index
    %12 = vector.load %arg5[%c0_9, %c0_10] : memref<1x128xf32, #tpu.memory_space<vmem>>, vector<1x128xf32>
    %13 = vector.broadcast %12 : vector<1x128xf32> to vector<128x128xf32>
    %14 = arith.addf %11, %13 : vector<128x128xf32>
    %cst_11 = arith.constant 0.000000e+00 : f32
    %15 = vector.broadcast %cst_11 : f32 to vector<128x128xf32>
    %16 = arith.maximumf %14, %15 : vector<128x128xf32>
    %17 = arith.truncf %16 : vector<128x128xf32> to vector<128x128xbf16>
    %c0_12 = arith.constant 0 : index
    %c0_13 = arith.constant 0 : index
    %18 = vector.load %arg6[%c0_12, %c0_13] : memref<128x128xbf16, #tpu.memory_space<vmem>>, vector<128x128xbf16>
    %cst_14 = arith.constant dense<0.000000e+00> : vector<128x128xf32>
    %19 = tpu.matmul %17, %18, %cst_14 {dimension_numbers = #tpu.dot_dimension_numbers<[1], [0], [0], [1], [0, 0, 1, 1], [], []>} : vector<128x128xbf16>, vector<128x128xbf16>, vector<128x128xf32> -> vector<128x128xf32>
    %c0_15 = arith.constant 0 : index
    %c0_16 = arith.constant 0 : index
    %20 = vector.load %arg7[%c0_15, %c0_16] : memref<1x128xf32, #tpu.memory_space<vmem>>, vector<1x128xf32>
    %21 = vector.broadcast %20 : vector<1x128xf32> to vector<128x128xf32>
    %22 = arith.addf %19, %21 : vector<128x128xf32>
    %cst_17 = arith.constant dense<0xFF800000> : vector<128xf32>
    %23 = vector.multi_reduction <maximumf>, %22, %cst_17 [1] : vector<128x128xf32> to vector<128xf32>
    %24 = vector.shape_cast %23 : vector<128xf32> to vector<128x1xf32>
    %25 = vector.broadcast %24 : vector<128x1xf32> to vector<128x128xf32>
    %26 = arith.subf %22, %25 : vector<128x128xf32>
    %27 = math.exp %26 : vector<128x128xf32>
    %cst_18 = arith.constant dense<0.000000e+00> : vector<128xf32>
    %28 = vector.multi_reduction <add>, %27, %cst_18 [1] : vector<128x128xf32> to vector<128xf32>
    %29 = vector.shape_cast %28 : vector<128xf32> to vector<128x1xf32>
    %30 = math.log %29 : vector<128x1xf32>
    %31 = vector.broadcast %30 : vector<128x1xf32> to vector<128x128xf32>
    %32 = arith.subf %26, %31 : vector<128x128xf32>
    %33 = arith.truncf %32 : vector<128x128xf32> to vector<128x128xbf16>
    %c0_19 = arith.constant 0 : index
    %c0_20 = arith.constant 0 : index
    %34 = vector.load %arg8[%c0_19, %c0_20] : memref<128x128xbf16, #tpu.memory_space<vmem>>, vector<128x128xbf16>
    tpu.vector_store %arg8[%c0_19, %c0_20], %33 {strides = array<i32>} : memref<128x128xbf16, #tpu.memory_space<vmem>>, vector<128x128xbf16>,
    return
  }
  func.func @transform_0(%arg0: i32) -> (i32, i32) {
    %c0_i32 = arith.constant 0 : i32
    %c0_i32_0 = arith.constant 0 : i32
    return %arg0, %c0_i32 : i32, i32
  }
  func.func @transform_1(%arg0: i32) -> (i32, i32) {
    %c0_i32 = arith.constant 0 : i32
    %c0_i32_0 = arith.constant 0 : i32
    %c0_i32_1 = arith.constant 0 : i32
    return %c0_i32, %c0_i32_0 : i32, i32
  }
  func.func @transform_2(%arg0: i32) -> (i32, i32) {
    %c0_i32 = arith.constant 0 : i32
    %c0_i32_0 = arith.constant 0 : i32
    %c0_i32_1 = arith.constant 0 : i32
    return %c0_i32, %c0_i32_0 : i32, i32
  }
  func.func @transform_3(%arg0: i32) -> (i32, i32) {
    %c0_i32 = arith.constant 0 : i32
    %c0_i32_0 = arith.constant 0 : i32
    %c0_i32_1 = arith.constant 0 : i32
    return %c0_i32, %c0_i32_0 : i32, i32
  }
  func.func @transform_4(%arg0: i32) -> (i32, i32) {
    %c0_i32 = arith.constant 0 : i32
    %c0_i32_0 = arith.constant 0 : i32
    %c0_i32_1 = arith.constant 0 : i32
    return %c0_i32, %c0_i32_0 : i32, i32
  }
  func.func @transform_5(%arg0: i32) -> (i32, i32) {
    %c0_i32 = arith.constant 0 : i32
    %c0_i32_0 = arith.constant 0 : i32
    %c0_i32_1 = arith.constant 0 : i32
    return %c0_i32, %c0_i32_0 : i32, i32
  }
  func.func @transform_6(%arg0: i32) -> (i32, i32) {
    %c0_i32 = arith.constant 0 : i32
    %c0_i32_0 = arith.constant 0 : i32
    %c0_i32_1 = arith.constant 0 : i32
    return %c0_i32, %c0_i32_0 : i32, i32
  }
  func.func @transform_7(%arg0: i32) -> (i32, i32) {
    %c0_i32 = arith.constant 0 : i32
    %c0_i32_0 = arith.constant 0 : i32
    return %arg0, %c0_i32 : i32, i32
  }
}

</mosaic_0001>

<llo_original>
// kernel: mlp4_forward_padded.1
$region0: #{mlp4_forward_padded.1}
  #allocation0 [shape = 'u32[]', space=smem, size = 0x4, offset = 0x4, fixed_abs, tag = 'smem constant byte address 0x4 - core index']
  #allocation1 [shape = 'u32[144,128]{1,0:T(1,128)}', space=vmem, size = 0x12000, scoped, tag = 'internal scratch']
  %s0 = inlined_call_operand.vmem [shape: f32[256,64], index: 0, kind: input, shape index: {}]
  %s1 = inlined_call_operand.vmem [shape: bf16[64,256], index: 1, kind: input, shape index: {}]
  %s2 = inlined_call_operand.vmem [shape: f32[1,256], index: 2, kind: input, shape index: {}]
  %s3 = inlined_call_operand.vmem [shape: bf16[256,128], index: 3, kind: input, shape index: {}]
  %s4 = inlined_call_operand.vmem [shape: f32[1,128], index: 4, kind: input, shape index: {}]
  %s5 = inlined_call_operand.vmem [shape: bf16[128,128], index: 5, kind: input, shape index: {}]
  %s6 = inlined_call_operand.vmem [shape: f32[1,128], index: 6, kind: input, shape index: {}]
  %s7 = inlined_call_operand.hbm [shape: bf16[256,128], index: 7, kind: output, shape index: {}]
  %s8 = sld [smem:[#allocation0]]
  $region61: #{mlp4_forward_padded.1} parent=0
    _
  %s10 = ssub.s32 1, %s8
  %s11 = scalar_select 0, %s10, %s8
  $region1: #{mlp4_forward_padded.1} parent=0
    #allocation2 [shape = 'u8[65536]{0}', space=vmem, size = 0x10000, scoped, tag = 'output window, operand 0']
    #allocation3 [shape = 's32[2]{0}', space=sflag, size = 0x8, scoped, tag = 'scoped memory for mlp4_forward_padded.1']
    %12 = vsyncpa [#allocation3], 0
    %s13 = scalar_lea.sflag [#allocation3], 1
    %14 = vsyncpa %s13, 0
    loop: start=0, step=1, limit=4
    $region2: #{mlp4_forward_padded.1} parent=1 // loop_pre_header
      _
    $region3: #{mlp4_forward_padded.1} parent=1 // loop_header
      %s16 = sphi 0, %s20
      %p17 = scmp.ge.s32.totalorder %s16, 4
      %s26 = sphi 0, %s28
      %s29 = sphi 0, %s26
      %s30 = sphi 0, %s29
      %s46 = sphi 0, %s30
      %s50 = sphi 0, %s50
      %s52 = sphi 0, %s50
      %s53 = sphi 0, %s52
      %s67 = sphi 0, %s53
      %s71 = sphi 0, %s71
      %s73 = sphi 0, %s71
      %s74 = sphi 0, %s73
      %s88 = sphi 0, %s74
      %s92 = sphi 0, %s92
      %s94 = sphi 0, %s92
      %s95 = sphi 0, %s94
      %s109 = sphi 0, %s95
      %s113 = sphi 0, %s113
      %s115 = sphi 0, %s113
      %s116 = sphi 0, %s115
      %s130 = sphi 0, %s116
      %s134 = sphi 0, %s134
      %s136 = sphi 0, %s134
      %s137 = sphi 0, %s136
      %s151 = sphi 0, %s137
      %s155 = sphi 0, %s155
      %s157 = sphi 0, %s155
      %s158 = sphi 0, %s157
      %s172 = sphi 0, %s158
      %s178 = sphi 0, %s180
      %s181 = sphi 0, %s178
      %s182 = sphi 0, %s181
      %s198 = sphi 0, %s182
    $region4: #{mlp4_forward_padded.1} parent=1 // loop_header_branch
      %19 = sbr.rel (%p17) target = $region8
    $region5: #{mlp4_forward_padded.1} parent=1 // loop_body
      %s21 = ssub.s32 %s16, 1
      %s22 = ssub.s32 %s16, 2
      %s23 = sadd.s32 %s16, 1
      %s24 = ssub.s32 %s16, %s23
      %p25 = scmp.eq.s32.totalorder %s24, 0
      %s27 = sadd.s32 %s26, 1
      %s28 = scalar_select %p25, %s26, %s27
      %p31 = pneg %p25
      %p32 = scmp.eq.s32.totalorder %s16, 1
      %p33 = por %p31, %p32
      %p34 = scmp.ne.s32.totalorder %s26, %s29
      %p35 = scmp.eq.s32.totalorder %s16, 0
      %p36 = por %p34, %p35
      %p37 = scmp.ne.s32.totalorder %s26, %s29
      %p38 = scmp.eq.s32.totalorder %s21, 1
      %p39 = por %p37, %p38
      %p40 = scmp.ne.s32.totalorder %s29, %s30
      %p41 = scmp.eq.s32.totalorder %s21, 0
      %p42 = por %p40, %p41
      %p43 = scmp.ne.s32.totalorder %s29, %s30
      %p44 = scmp.eq.s32.totalorder %s22, 1
      %p45 = por %p43, %p44
      %p47 = scmp.ne.s32.totalorder %s30, %s46
      %p48 = scmp.eq.s32.totalorder %s22, 0
      %p49 = por %p47, %p48
      %s51 = sadd.s32 %s50, 1
      %p54 = scmp.eq.s32.totalorder %s16, 1
      %p55 = scmp.ne.s32.totalorder %s50, %s52
      %p56 = scmp.eq.s32.totalorder %s16, 0
      %p57 = por %p55, %p56
      %p58 = scmp.ne.s32.totalorder %s50, %s52
      %p59 = scmp.eq.s32.totalorder %s21, 1
      %p60 = por %p58, %p59
      %p61 = scmp.ne.s32.totalorder %s52, %s53
      %p62 = scmp.eq.s32.totalorder %s21, 0
      %p63 = por %p61, %p62
      %p64 = scmp.ne.s32.totalorder %s52, %s53
      %p65 = scmp.eq.s32.totalorder %s22, 1
      %p66 = por %p64, %p65
      %p68 = scmp.ne.s32.totalorder %s53, %s67
      %p69 = scmp.eq.s32.totalorder %s22, 0
      %p70 = por %p68, %p69
      %s72 = sadd.s32 %s71, 1
      %p75 = scmp.eq.s32.totalorder %s16, 1
      %p76 = scmp.ne.s32.totalorder %s71, %s73
      %p77 = scmp.eq.s32.totalorder %s16, 0
      %p78 = por %p76, %p77
      %p79 = scmp.ne.s32.totalorder %s71, %s73
      %p80 = scmp.eq.s32.totalorder %s21, 1
      %p81 = por %p79, %p80
      %p82 = scmp.ne.s32.totalorder %s73, %s74
      %p83 = scmp.eq.s32.totalorder %s21, 0
      %p84 = por %p82, %p83
      %p85 = scmp.ne.s32.totalorder %s73, %s74
      %p86 = scmp.eq.s32.totalorder %s22, 1
      %p87 = por %p85, %p86
      %p89 = scmp.ne.s32.totalorder %s74, %s88
      %p90 = scmp.eq.s32.totalorder %s22, 0
      %p91 = por %p89, %p90
      %s93 = sadd.s32 %s92, 1
      %p96 = scmp.eq.s32.totalorder %s16, 1
      %p97 = scmp.ne.s32.totalorder %s92, %s94
      %p98 = scmp.eq.s32.totalorder %s16, 0
      %p99 = por %p97, %p98
      %p100 = scmp.ne.s32.totalorder %s92, %s94
      %p101 = scmp.eq.s32.totalorder %s21, 1
      %p102 = por %p100, %p101
      %p103 = scmp.ne.s32.totalorder %s94, %s95
      %p104 = scmp.eq.s32.totalorder %s21, 0
      %p105 = por %p103, %p104
      %p106 = scmp.ne.s32.totalorder %s94, %s95
      %p107 = scmp.eq.s32.totalorder %s22, 1
      %p108 = por %p106, %p107
      %p110 = scmp.ne.s32.totalorder %s95, %s109
      %p111 = scmp.eq.s32.totalorder %s22, 0
      %p112 = por %p110, %p111
      %s114 = sadd.s32 %s113, 1
      %p117 = scmp.eq.s32.totalorder %s16, 1
      %p118 = scmp.ne.s32.totalorder %s113, %s115
      %p119 = scmp.eq.s32.totalorder %s16, 0
      %p120 = por %p118, %p119
      %p121 = scmp.ne.s32.totalorder %s113, %s115
      %p122 = scmp.eq.s32.totalorder %s21, 1
      %p123 = por %p121, %p122
      %p124 = scmp.ne.s32.totalorder %s115, %s116
      %p125 = scmp.eq.s32.totalorder %s21, 0
      %p126 = por %p124, %p125
      %p127 = scmp.ne.s32.totalorder %s115, %s116
      %p128 = scmp.eq.s32.totalorder %s22, 1
      %p129 = por %p127, %p128
      %p131 = scmp.ne.s32.totalorder %s116, %s130
      %p132 = scmp.eq.s32.totalorder %s22, 0
      %p133 = por %p131, %p132
      %s135 = sadd.s32 %s134, 1
      %p138 = scmp.eq.s32.totalorder %s16, 1
      %p139 = scmp.ne.s32.totalorder %s134, %s136
      %p140 = scmp.eq.s32.totalorder %s16, 0
      %p141 = por %p139, %p140
      %p142 = scmp.ne.s32.totalorder %s134, %s136
      %p143 = scmp.eq.s32.totalorder %s21, 1
      %p144 = por %p142, %p143
      %p145 = scmp.ne.s32.totalorder %s136, %s137
      %p146 = scmp.eq.s32.totalorder %s21, 0
      %p147 = por %p145, %p146
      %p148 = scmp.ne.s32.totalorder %s136, %s137
      %p149 = scmp.eq.s32.totalorder %s22, 1
      %p150 = por %p148, %p149
      %p152 = scmp.ne.s32.totalorder %s137, %s151
      %p153 = scmp.eq.s32.totalorder %s22, 0
      %p154 = por %p152, %p153
      %s156 = sadd.s32 %s155, 1
      %p159 = scmp.eq.s32.totalorder %s16, 1
      %p160 = scmp.ne.s32.totalorder %s155, %s157
      %p161 = scmp.eq.s32.totalorder %s16, 0
      %p162 = por %p160, %p161
      %p163 = scmp.ne.s32.totalorder %s155, %s157
      %p164 = scmp.eq.s32.totalorder %s21, 1
      %p165 = por %p163, %p164
      %p166 = scmp.ne.s32.totalorder %s157, %s158
      %p167 = scmp.eq.s32.totalorder %s21, 0
      %p168 = por %p166, %p167
      %p169 = scmp.ne.s32.totalorder %s157, %s158
      %p170 = scmp.eq.s32.totalorder %s22, 1
      %p171 = por %p169, %p170
      %p173 = scmp.ne.s32.totalorder %s158, %s172
      %p174 = scmp.eq.s32.totalorder %s22, 0
      %p175 = por %p173, %p174
      %s176 = ssub.s32 %s16, %s23
      %p177 = scmp.eq.s32.totalorder %s176, 0
      %s179 = sadd.s32 %s178, 1
      %s180 = scalar_select %p177, %s178, %s179
      %p183 = pneg %p177
      %p184 = scmp.eq.s32.totalorder %s16, 1
      %p185 = por %p183, %p184
      %p186 = scmp.ne.s32.totalorder %s178, %s181
      %p187 = scmp.eq.s32.totalorder %s16, 0
      %p188 = por %p186, %p187
      %p189 = scmp.ne.s32.totalorder %s178, %s181
      %p190 = scmp.eq.s32.totalorder %s21, 1
      %p191 = por %p189, %p190
      %p192 = scmp.ne.s32.totalorder %s181, %s182
      %p193 = scmp.eq.s32.totalorder %s21, 0
      %p194 = por %p192, %p193
      %p195 = scmp.ne.s32.totalorder %s181, %s182
      %p196 = scmp.eq.s32.totalorder %s22, 1
      %p197 = por %p195, %p196
      %p199 = scmp.ne.s32.totalorder %s182, %s198
      %p200 = scmp.eq.s32.totalorder %s22, 0
      %p201 = por %p199, %p200
      %p202 = scmp.le.s32.totalorder 1, %s16
      %p203 = scmp.lt.s32.totalorder %s16, 3
      %p204 = pnand %p202, %p203
      %p205 = pneg %p204
      // Predicated region
      $region9: #{mlp4_forward_padded.1} parent=5 // pred_check
        _
      $region10: #{mlp4_forward_padded.1} parent=5 // pred_check_branch
        %207 = sbr.rel (%p204) target = $region12
      $region11: #{mlp4_forward_padded.1} parent=5 // pred_region
        %s208 = ssub.s32 %s16, 1
        // Predicated region
        $region13: #{mlp4_forward_padded.1} parent=11 // pred_check
          %p209 = pneg %p63
        $region14: #{mlp4_forward_padded.1} parent=11 // pred_check_branch
          %211 = sbr.rel (%p209) target = $region16
        $region15: #{mlp4_forward_padded.1} parent=11 // pred_region
          _
        $region16: #{mlp4_forward_padded.1} parent=11 // pred_fallthru
          _
        // Predicated region
        $region17: #{mlp4_forward_padded.1} parent=11 // pred_check
          %p212 = pneg %p84
        $region18: #{mlp4_forward_padded.1} parent=11 // pred_check_branch
          %214 = sbr.rel (%p212) target = $region20
        $region19: #{mlp4_forward_padded.1} parent=11 // pred_region
          _
        $region20: #{mlp4_forward_padded.1} parent=11 // pred_fallthru
          _
        // Predicated region
        $region21: #{mlp4_forward_padded.1} parent=11 // pred_check
          %p215 = pneg %p105
        $region22: #{mlp4_forward_padded.1} parent=11 // pred_check_branch
          %217 = sbr.rel (%p215) target = $region24
        $region23: #{mlp4_forward_padded.1} parent=11 // pred_region
          _
        $region24: #{mlp4_forward_padded.1} parent=11 // pred_fallthru
          _
        // Predicated region
        $region25: #{mlp4_forward_padded.1} parent=11 // pred_check
          %p218 = pneg %p126
        $region26: #{mlp4_forward_padded.1} parent=11 // pred_check_branch
          %220 = sbr.rel (%p218) target = $region28
        $region27: #{mlp4_forward_padded.1} parent=11 // pred_region
          _
        $region28: #{mlp4_forward_padded.1} parent=11 // pred_fallthru
          _
        // Predicated region
        $region29: #{mlp4_forward_padded.1} parent=11 // pred_check
          %p221 = pneg %p147
        $region30: #{mlp4_forward_padded.1} parent=11 // pred_check_branch
          %223 = sbr.rel (%p221) target = $region32
        $region31: #{mlp4_forward_padded.1} parent=11 // pred_region
          _
        $region32: #{mlp4_forward_padded.1} parent=11 // pred_fallthru
          _
        // Predicated region
        $region33: #{mlp4_forward_padded.1} parent=11 // pred_check
          %p224 = pneg %p168
        $region34: #{mlp4_forward_padded.1} parent=11 // pred_check_branch
          %226 = sbr.rel (%p224) target = $region36
        $region35: #{mlp4_forward_padded.1} parent=11 // pred_region
          _
        $region36: #{mlp4_forward_padded.1} parent=11 // pred_fallthru
          _
      $region12: #{mlp4_forward_padded.1} parent=5 // pred_fallthru
        _
      %p227 = scmp.lt.s32.totalorder %s16, 2
      // Predicated region
      $region37: #{mlp4_forward_padded.1} parent=5 // pred_check
        %p228 = pneg %p227
      $region38: #{mlp4_forward_padded.1} parent=5 // pred_check_branch
        %230 = sbr.rel (%p228) target = $region40
      $region39: #{mlp4_forward_padded.1} parent=5 // pred_region
        // Predicated region
        $region41: #{mlp4_forward_padded.1} parent=39 // pred_check
          %p231 = pneg %p36
        $region42: #{mlp4_forward_padded.1} parent=39 // pred_check_branch
          %233 = sbr.rel (%p231) target = $region44
        $region43: #{mlp4_forward_padded.1} parent=39 // pred_region
          %s234 = smul.u32 16, %s16
          %p235 = scmp.lt.s32.totalorder %s234, 31
          %s236 = scalar_select %p235, %s234, 31
          %s237 = smul.addr %s236, 8
          %s238 = scalar_lea.vmem %s0, %s237
          %s239 = smul.u32 16, %s16
        $region44: #{mlp4_forward_padded.1} parent=39 // pred_fallthru
          _
      $region40: #{mlp4_forward_padded.1} parent=5 // pred_fallthru
        _
      %p240 = scmp.le.s32.totalorder 1, %s16
      %p241 = scmp.lt.s32.totalorder %s16, 3
      %p242 = pnand %p240, %p241
      %p243 = pneg %p242
      // Predicated region
      $region45: #{mlp4_forward_padded.1} parent=5 // pred_check
        _
      $region46: #{mlp4_forward_padded.1} parent=5 // pred_check_branch
        %245 = sbr.rel (%p242) target = $region48
      $region47: #{mlp4_forward_padded.1} parent=5 // pred_region
        %s246 = ssub.s32 %s16, 1
        %s247 = smul.u32 16, %s21
        %p248 = scmp.lt.s32.totalorder %s247, 31
        %s249 = scalar_select %p248, %s247, 31
        %s250 = smul.addr %s249, 8
        %s251 = scalar_lea.vmem %s0, %s250
        %p252 = pneg %p42
        %p253 = pneg %p39
        %p254 = pneg %p63
        %p255 = pneg %p60
        %p256 = pneg %p84
        %p257 = pneg %p81
        %p258 = pneg %p105
        %p259 = pneg %p102
        %p260 = pneg %p126
        %p261 = pneg %p123
        %p262 = pneg %p147
        %p263 = pneg %p144
        %p264 = pneg %p168
        %p265 = pneg %p165
        %p266 = pneg %p194
        %p267 = pneg %p191
        %s268 = sand.u32 %s181, 1
        %s269 = scalar_lea.sflag [#allocation3], %s268
        %s270 = sand.u32 %s181, 1
        %s271 = smul.addr %s270, 64
        %s272 = scalar_lea.vmem [#allocation2], %s271
        %s273 = smul.u32 16, %s21
        %p274 = scmp.lt.s32.totalorder %s273, 31
        %s275 = scalar_select %p274, %s273, 31
        %s276 = smul.addr %s275, 8
        %s277 = scalar_lea.vmem %s0, %s276
        %s278 = smul.u32 16, %s21
        %s279 = smul.u32 16, %s21
        %v281 = vld [vmem:[%s277] sm:$0xff]
        %v282 = vld [vmem:[%s277 + $0x8] sm:$0xff]
        %v283 = vld [vmem:[%s277 + $0x10] sm:$0xff]
        %v284 = vld [vmem:[%s277 + $0x18] sm:$0xff]
        %v285 = vld [vmem:[%s277 + $0x20] sm:$0xff]
        %v286 = vld [vmem:[%s277 + $0x28] sm:$0xff]
        %v287 = vld [vmem:[%s277 + $0x30] sm:$0xff]
        %v288 = vld [vmem:[%s277 + $0x38] sm:$0xff]
        %v289 = vld [vmem:[%s277 + $0x40] sm:$0xff]
        %v290 = vld [vmem:[%s277 + $0x48] sm:$0xff]
        %v291 = vld [vmem:[%s277 + $0x50] sm:$0xff]
        %v292 = vld [vmem:[%s277 + $0x58] sm:$0xff]
        %v293 = vld [vmem:[%s277 + $0x60] sm:$0xff]
        %v294 = vld [vmem:[%s277 + $0x68] sm:$0xff]
        %v295 = vld [vmem:[%s277 + $0x70] sm:$0xff]
        %v296 = vld [vmem:[%s277 + $0x78] sm:$0xff]
        %v297 = vpack.c.bf16 %v282, %v281
        %v298 = vpack.c.bf16 %v284, %v283
        %v299 = vpack.c.bf16 %v286, %v285
        %v300 = vpack.c.bf16 %v288, %v287
        %v301 = vpack.c.bf16 %v290, %v289
        %v302 = vpack.c.bf16 %v292, %v291
        %v303 = vpack.c.bf16 %v294, %v293
        %v304 = vpack.c.bf16 %v296, %v295
        %v305 = vld [vmem:[%s1] sm:$0xff]
        %v306 = vld [vmem:[%s1 + $0x8] sm:$0xff]
        %v307 = vld [vmem:[%s1 + $0x10] sm:$0xff]
        %v308 = vld [vmem:[%s1 + $0x18] sm:$0xff]
        %v309 = vld [vmem:[%s1 + $0x20] sm:$0xff]
        %v310 = vld [vmem:[%s1 + $0x28] sm:$0xff]
        %v311 = vld [vmem:[%s1 + $0x30] sm:$0xff]
        %v312 = vld [vmem:[%s1 + $0x38] sm:$0xff]
        %v313 = vld [vmem:[%s2] sm:$0x3]
        %v315 = vlaneseq
        %v316 = vshrl.u32 %v315, 7
        %v317 = vsub.s32 0, %v316
        %v318 = vrot.slane %v313, %v317
        %v319 = vlaneseq
        %v320 = vshrl.u32 %v319, 7
        %v321 = vsub.s32 1, %v320
        %v322 = vrot.slane %v313, %v321
        %v333 = vunpack.c.l.b16 %v305
        %v334 = vunpack.c.h.b16 %v305
        %v335 = vunpack.c.l.b16 %v306
        %v336 = vunpack.c.h.b16 %v306
        %v337 = vunpack.c.l.b16 %v307
        %v338 = vunpack.c.h.b16 %v307
        %v339 = vunpack.c.l.b16 %v308
        %v340 = vunpack.c.h.b16 %v308
        %v341 = vunpack.c.l.b16 %v309
        %v342 = vunpack.c.h.b16 %v309
        %v343 = vunpack.c.l.b16 %v310
        %v344 = vunpack.c.h.b16 %v310
        %v345 = vunpack.c.l.b16 %v311
        %v346 = vunpack.c.h.b16 %v311
        %v347 = vunpack.c.l.b16 %v312
        %v348 = vunpack.c.h.b16 %v312
        %v349 = vpack.c.b16 %v335, %v333
        %v350 = vpack.c.b16 %v336, %v334
        %v351 = vpack.c.b16 %v339, %v337
        %v352 = vpack.c.b16 %v340, %v338
        %v353 = vpack.c.b16 %v343, %v341
        %v354 = vpack.c.b16 %v344, %v342
        %v355 = vpack.c.b16 %v347, %v345
        %v356 = vpack.c.b16 %v348, %v346
        %vm365 = vcmask 523264
        %v367 = vsel %vm365, %v297, 0
        %v370 = vsel %vm365, %v298, 0
        %v373 = vsel %vm365, %v299, 0
        %v376 = vsel %vm365, %v300, 0
        %v379 = vsel %vm365, %v301, 0
        %v382 = vsel %vm365, %v302, 0
        %v385 = vsel %vm365, %v303, 0
        %v388 = vsel %vm365, %v304, 0
        %390 = vmatprep.subr.bf16.mxu0 %v350
        %391 = vmatpush1.bf16.msra.mxu0 %v349
        %392 = vmatprep.subr.bf16.mxu0 %v352
        %393 = vmatpush1.bf16.msra.mxu0 %v351
        %394 = vmatprep.subr.bf16.mxu0 %v354
        %395 = vmatpush1.bf16.msra.mxu0 %v353
        %396 = vmatprep.subr.bf16.mxu0 %v356
        %397 = vmatpush1.bf16.msra.mxu0 %v355
        %398 = vmatprep.subr.bf16.mxu0 0
        %399 = vmatpush1.bf16.msra.mxu0 0
        %400 = vmatprep.subr.bf16.mxu0 0
        %401 = vmatpush1.bf16.msra.mxu0 0
        %402 = vmatprep.subr.bf16.mxu0 0
        %403 = vmatpush1.bf16.msra.mxu0 0
        %404 = vmatprep.subr.bf16.mxu0 0
        %405 = vmatpush1.bf16.msra.mxu0 0
        %406 = vmatprep.subr.bf16.mxu0 0
        %407 = vmatpush1.bf16.msra.mxu0 0
        %408 = vmatprep.subr.bf16.mxu0 0
        %409 = vmatpush1.bf16.msra.mxu0 0
        %410 = vmatprep.subr.bf16.mxu0 0
        %411 = vmatpush1.bf16.msra.mxu0 0
        %412 = vmatprep.subr.bf16.mxu0 0
        %413 = vmatpush1.bf16.msra.mxu0 0
        %414 = vmatprep.subr.bf16.mxu0 0
        %415 = vmatpush1.bf16.msra.mxu0 0
        %416 = vmatprep.subr.bf16.mxu0 0
        %417 = vmatpush1.bf16.msra.mxu0 0
        %418 = vmatprep.subr.bf16.mxu0 0
        %419 = vmatpush1.bf16.msra.mxu0 0
        %420 = vmatprep.subr.bf16.mxu0 0
        %421 = vmatpush1.bf16.msra.mxu0 0
        %422 = vmatprep.mubr.bf16.mxu0 0
        %423 = vmatmul.mubr.bf16.gmra.mrb[0].mxu0 %v367
        %v424 = vpop.f32.mrb[0].mxu0
        %v425 = vadd.f32 %v318, %v424
        %v426 = vpop.f32.mrb[0].mxu0
        %v427 = vadd.f32 %v322, %v426
        %v428 = vpop.f32.mrb[0].mxu0
        %v429 = vadd.f32 %v318, %v428
        %v430 = vpop.f32.mrb[0].mxu0
        %v431 = vadd.f32 %v322, %v430
        %432 = vmatprep.mubr.bf16.mxu0 0
        %433 = vmatmul.mubr.bf16.gmra.mrb[0].mxu0 %v370
        %v434 = vpop.f32.mrb[0].mxu0
        %v435 = vadd.f32 %v318, %v434
        %v436 = vpop.f32.mrb[0].mxu0
        %v437 = vadd.f32 %v322, %v436
        %v438 = vpop.f32.mrb[0].mxu0
        %v439 = vadd.f32 %v318, %v438
        %v440 = vpop.f32.mrb[0].mxu0
        %v441 = vadd.f32 %v322, %v440
        %442 = vmatprep.mubr.bf16.mxu0 0
        %443 = vmatmul.mubr.bf16.gmra.mrb[0].mxu0 %v373
        %v444 = vpop.f32.mrb[0].mxu0
        %v445 = vadd.f32 %v318, %v444
        %v446 = vpop.f32.mrb[0].mxu0
        %v447 = vadd.f32 %v322, %v446
        %v448 = vpop.f32.mrb[0].mxu0
        %v449 = vadd.f32 %v318, %v448
        %v450 = vpop.f32.mrb[0].mxu0
        %v451 = vadd.f32 %v322, %v450
        %452 = vmatprep.mubr.bf16.mxu0 0
        %453 = vmatmul.mubr.bf16.gmra.mrb[0].mxu0 %v376
        %v454 = vpop.f32.mrb[0].mxu0
        %v455 = vadd.f32 %v318, %v454
        %v456 = vpop.f32.mrb[0].mxu0
        %v457 = vadd.f32 %v322, %v456
        %v458 = vpop.f32.mrb[0].mxu0
        %v459 = vadd.f32 %v318, %v458
        %v460 = vpop.f32.mrb[0].mxu0
        %v461 = vadd.f32 %v322, %v460
        %462 = vmatprep.mubr.bf16.mxu0 0
        %463 = vmatmul.mubr.bf16.gmra.mrb[0].mxu0 %v379
        %v464 = vpop.f32.mrb[0].mxu0
        %v465 = vadd.f32 %v318, %v464
        %v466 = vpop.f32.mrb[0].mxu0
        %v467 = vadd.f32 %v322, %v466
        %v468 = vpop.f32.mrb[0].mxu0
        %v469 = vadd.f32 %v318, %v468
        %v470 = vpop.f32.mrb[0].mxu0
        %v471 = vadd.f32 %v322, %v470
        %472 = vmatprep.mubr.bf16.mxu0 0
        %473 = vmatmul.mubr.bf16.gmra.mrb[0].mxu0 %v382
        %v474 = vpop.f32.mrb[0].mxu0
        %v475 = vadd.f32 %v318, %v474
        %v476 = vpop.f32.mrb[0].mxu0
        %v477 = vadd.f32 %v322, %v476
        %v478 = vpop.f32.mrb[0].mxu0
        %v479 = vadd.f32 %v318, %v478
        %v480 = vpop.f32.mrb[0].mxu0
        %v481 = vadd.f32 %v322, %v480
        %482 = vmatprep.mubr.bf16.mxu0 0
        %483 = vmatmul.mubr.bf16.gmra.mrb[0].mxu0 %v385
        %v484 = vpop.f32.mrb[0].mxu0
        %v485 = vadd.f32 %v318, %v484
        %v486 = vpop.f32.mrb[0].mxu0
        %v487 = vadd.f32 %v322, %v486
        %v488 = vpop.f32.mrb[0].mxu0
        %v489 = vadd.f32 %v318, %v488
        %v490 = vpop.f32.mrb[0].mxu0
        %v491 = vadd.f32 %v322, %v490
        %492 = vmatprep.mubr.bf16.mxu0 0
        %493 = vmatmul.mubr.bf16.gmra.mrb[0].mxu0 %v388
        %v494 = vpop.f32.mrb[0].mxu0
        %v495 = vadd.f32 %v318, %v494
        %v496 = vpop.f32.mrb[0].mxu0
        %v497 = vadd.f32 %v322, %v496
        %v498 = vpop.f32.mrb[0].mxu0
        %v499 = vadd.f32 %v318, %v498
        %v500 = vpop.f32.mrb[0].mxu0
        %v501 = vadd.f32 %v322, %v500
        %502 = vdwg.mxu0
        %v503 = vmax.f32 %v425, 0.0
        %v504 = vmax.f32 %v427, 0.0
        %v505 = vmax.f32 %v429, 0.0
        %v506 = vmax.f32 %v431, 0.0
        %v507 = vmax.f32 %v435, 0.0
        %v508 = vmax.f32 %v437, 0.0
        %v509 = vmax.f32 %v439, 0.0
        %v510 = vmax.f32 %v441, 0.0
        %v511 = vmax.f32 %v445, 0.0
        %v512 = vmax.f32 %v447, 0.0
        %v513 = vmax.f32 %v449, 0.0
        %v514 = vmax.f32 %v451, 0.0
        %v515 = vmax.f32 %v455, 0.0
        %v516 = vmax.f32 %v457, 0.0
        %v517 = vmax.f32 %v459, 0.0
        %v518 = vmax.f32 %v461, 0.0
        %v519 = vmax.f32 %v465, 0.0
        %v520 = vmax.f32 %v467, 0.0
        %v521 = vmax.f32 %v469, 0.0
        %v522 = vmax.f32 %v471, 0.0
        %v523 = vmax.f32 %v475, 0.0
        %v524 = vmax.f32 %v477, 0.0
        %v525 = vmax.f32 %v479, 0.0
        %v526 = vmax.f32 %v481, 0.0
        %v527 = vmax.f32 %v485, 0.0
        %v528 = vmax.f32 %v487, 0.0
        %v529 = vmax.f32 %v489, 0.0
        %v530 = vmax.f32 %v491, 0.0
        %v531 = vmax.f32 %v495, 0.0
        %v532 = vmax.f32 %v497, 0.0
        %v533 = vmax.f32 %v499, 0.0
        %v534 = vmax.f32 %v501, 0.0
        %v535 = vpack.c.bf16 %v505, %v503
        %v536 = vpack.c.bf16 %v506, %v504
        %v537 = vpack.c.bf16 %v509, %v507
        %v538 = vpack.c.bf16 %v510, %v508
        %v539 = vpack.c.bf16 %v513, %v511
        %v540 = vpack.c.bf16 %v514, %v512
        %v541 = vpack.c.bf16 %v517, %v515
        %v542 = vpack.c.bf16 %v518, %v516
        %v543 = vpack.c.bf16 %v521, %v519
        %v544 = vpack.c.bf16 %v522, %v520
        %v545 = vpack.c.bf16 %v525, %v523
        %v546 = vpack.c.bf16 %v526, %v524
        %v547 = vpack.c.bf16 %v529, %v527
        %v548 = vpack.c.bf16 %v530, %v528
        %v549 = vpack.c.bf16 %v533, %v531
        %v550 = vpack.c.bf16 %v534, %v532
        %v551 = vld [vmem:[%s3] sm:$0xf]
        %v552 = vld [vmem:[%s3 + $0x4] sm:$0xf]
        %v553 = vld [vmem:[%s3 + $0x8] sm:$0xf]
        %v554 = vld [vmem:[%s3 + $0xc] sm:$0xf]
        %v555 = vld [vmem:[%s3 + $0x10] sm:$0xf]
        %v556 = vld [vmem:[%s3 + $0x14] sm:$0xf]
        %v557 = vld [vmem:[%s3 + $0x18] sm:$0xf]
        %v558 = vld [vmem:[%s3 + $0x1c] sm:$0xf]
        %v559 = vld [vmem:[%s3 + $0x20] sm:$0xf]
        %v560 = vld [vmem:[%s3 + $0x24] sm:$0xf]
        %v561 = vld [vmem:[%s3 + $0x28] sm:$0xf]
        %v562 = vld [vmem:[%s3 + $0x2c] sm:$0xf]
        %v563 = vld [vmem:[%s3 + $0x30] sm:$0xf]
        %v564 = vld [vmem:[%s3 + $0x34] sm:$0xf]
        %v565 = vld [vmem:[%s3 + $0x38] sm:$0xf]
        %v566 = vld [vmem:[%s3 + $0x3c] sm:$0xf]
        %v567 = vld [vmem:[%s3 + $0x40] sm:$0xf]
        %v568 = vld [vmem:[%s3 + $0x44] sm:$0xf]
        %v569 = vld [vmem:[%s3 + $0x48] sm:$0xf]
        %v570 = vld [vmem:[%s3 + $0x4c] sm:$0xf]
        %v571 = vld [vmem:[%s3 + $0x50] sm:$0xf]
        %v572 = vld [vmem:[%s3 + $0x54] sm:$0xf]
        %v573 = vld [vmem:[%s3 + $0x58] sm:$0xf]
        %v574 = vld [vmem:[%s3 + $0x5c] sm:$0xf]
        %v575 = vld [vmem:[%s3 + $0x60] sm:$0xf]
        %v576 = vld [vmem:[%s3 + $0x64] sm:$0xf]
        %v577 = vld [vmem:[%s3 + $0x68] sm:$0xf]
        %v578 = vld [vmem:[%s3 + $0x6c] sm:$0xf]
        %v579 = vld [vmem:[%s3 + $0x70] sm:$0xf]
        %v580 = vld [vmem:[%s3 + $0x74] sm:$0xf]
        %v581 = vld [vmem:[%s3 + $0x78] sm:$0xf]
        %v582 = vld [vmem:[%s3 + $0x7c] sm:$0xf]
        %v583 = vld [vmem:[%s4] sm:$0x1]
        %v585 = vlaneseq
        %v586 = vshrl.u32 %v585, 7
        %v587 = vsub.s32 0, %v586
        %v588 = vrot.slane %v583, %v587
        %v622 = vunpack.c.l.b16 %v551
        %v623 = vunpack.c.l.b16 %v552
        %v624 = vunpack.c.l.b16 %v553
        %v625 = vunpack.c.l.b16 %v554
        %v626 = vunpack.c.l.b16 %v555
        %v627 = vunpack.c.l.b16 %v556
        %v628 = vunpack.c.l.b16 %v557
        %v629 = vunpack.c.l.b16 %v558
        %v630 = vunpack.c.l.b16 %v559
        %v631 = vunpack.c.l.b16 %v560
        %v632 = vunpack.c.l.b16 %v561
        %v633 = vunpack.c.l.b16 %v562
        %v634 = vunpack.c.l.b16 %v563
        %v635 = vunpack.c.l.b16 %v564
        %v636 = vunpack.c.l.b16 %v565
        %v637 = vunpack.c.l.b16 %v566
        %v638 = vunpack.c.l.b16 %v567
        %v639 = vunpack.c.l.b16 %v568
        %v640 = vunpack.c.l.b16 %v569
        %v641 = vunpack.c.l.b16 %v570
        %v642 = vunpack.c.l.b16 %v571
        %v643 = vunpack.c.l.b16 %v572
        %v644 = vunpack.c.l.b16 %v573
        %v645 = vunpack.c.l.b16 %v574
        %v646 = vunpack.c.l.b16 %v575
        %v647 = vunpack.c.l.b16 %v576
        %v648 = vunpack.c.l.b16 %v577
        %v649 = vunpack.c.l.b16 %v578
        %v650 = vunpack.c.l.b16 %v579
        %v651 = vunpack.c.l.b16 %v580
        %v652 = vunpack.c.l.b16 %v581
        %v653 = vunpack.c.l.b16 %v582
        %v654 = vpack.c.b16 %v623, %v622
        %v655 = vpack.c.b16 %v625, %v624
        %v656 = vpack.c.b16 %v627, %v626
        %v657 = vpack.c.b16 %v629, %v628
        %v658 = vpack.c.b16 %v631, %v630
        %v659 = vpack.c.b16 %v633, %v632
        %v660 = vpack.c.b16 %v635, %v634
        %v661 = vpack.c.b16 %v637, %v636
        %v662 = vpack.c.b16 %v639, %v638
        %v663 = vpack.c.b16 %v641, %v640
        %v664 = vpack.c.b16 %v643, %v642
        %v665 = vpack.c.b16 %v645, %v644
        %v666 = vpack.c.b16 %v647, %v646
        %v667 = vpack.c.b16 %v649, %v648
        %v668 = vpack.c.b16 %v651, %v650
        %v669 = vpack.c.b16 %v653, %v652
        %686 = vmatprep.subr.bf16.mxu0 0
        %687 = vmatpush1.bf16.msra.mxu0 %v654
        %688 = vmatprep.subr.bf16.mxu0 0
        %689 = vmatpush1.bf16.msra.mxu0 %v655
        %690 = vmatprep.subr.bf16.mxu0 0
        %691 = vmatpush1.bf16.msra.mxu0 %v656
        %692 = vmatprep.subr.bf16.mxu0 0
        %693 = vmatpush1.bf16.msra.mxu0 %v657
        %694 = vmatprep.subr.bf16.mxu0 0
        %695 = vmatpush1.bf16.msra.mxu0 %v658
        %696 = vmatprep.subr.bf16.mxu0 0
        %697 = vmatpush1.bf16.msra.mxu0 %v659
        %698 = vmatprep.subr.bf16.mxu0 0
        %699 = vmatpush1.bf16.msra.mxu0 %v660
        %700 = vmatprep.subr.bf16.mxu0 0
        %701 = vmatpush1.bf16.msra.mxu0 %v661
        %702 = vmatprep.subr.bf16.mxu0 0
        %703 = vmatpush1.bf16.msra.mxu0 %v662
        %704 = vmatprep.subr.bf16.mxu0 0
        %705 = vmatpush1.bf16.msra.mxu0 %v663
        %706 = vmatprep.subr.bf16.mxu0 0
        %707 = vmatpush1.bf16.msra.mxu0 %v664
        %708 = vmatprep.subr.bf16.mxu0 0
        %709 = vmatpush1.bf16.msra.mxu0 %v665
        %710 = vmatprep.subr.bf16.mxu0 0
        %711 = vmatpush1.bf16.msra.mxu0 %v666
        %712 = vmatprep.subr.bf16.mxu0 0
        %713 = vmatpush1.bf16.msra.mxu0 %v667
        %714 = vmatprep.subr.bf16.mxu0 0
        %715 = vmatpush1.bf16.msra.mxu0 %v668
        %716 = vmatprep.subr.bf16.mxu0 0
        %717 = vmatpush1.bf16.msra.mxu0 %v669
        %718 = vmatprep.mubr.bf16.mxu0 %v536
        %719 = vmatmul.mubr.bf16.gmra.mrb[0].mxu0 %v535
        %v720 = vpop.f32.mrb[0].mxu0
        %v721 = vadd.f32 %v588, %v720
        %v722 = vpop.f32.mrb[0].mxu0
        %v723 = vpop.f32.mrb[0].mxu0
        %v724 = vadd.f32 %v588, %v723
        %v725 = vpop.f32.mrb[0].mxu0
        %726 = vmatprep.mubr.bf16.mxu0 %v538
        %727 = vmatmul.mubr.bf16.gmra.mrb[0].mxu0 %v537
        %v728 = vpop.f32.mrb[0].mxu0
        %v729 = vadd.f32 %v588, %v728
        %v730 = vpop.f32.mrb[0].mxu0
        %v731 = vpop.f32.mrb[0].mxu0
        %v732 = vadd.f32 %v588, %v731
        %v733 = vpop.f32.mrb[0].mxu0
        %734 = vmatprep.mubr.bf16.mxu0 %v540
        %735 = vmatmul.mubr.bf16.gmra.mrb[0].mxu0 %v539
        %v736 = vpop.f32.mrb[0].mxu0
        %v737 = vadd.f32 %v588, %v736
        %v738 = vpop.f32.mrb[0].mxu0
        %v739 = vpop.f32.mrb[0].mxu0
        %v740 = vadd.f32 %v588, %v739
        %v741 = vpop.f32.mrb[0].mxu0
        %742 = vmatprep.mubr.bf16.mxu0 %v542
        %743 = vmatmul.mubr.bf16.gmra.mrb[0].mxu0 %v541
        %v744 = vpop.f32.mrb[0].mxu0
        %v745 = vadd.f32 %v588, %v744
        %v746 = vpop.f32.mrb[0].mxu0
        %v747 = vpop.f32.mrb[0].mxu0
        %v748 = vadd.f32 %v588, %v747
        %v749 = vpop.f32.mrb[0].mxu0
        %750 = vmatprep.mubr.bf16.mxu0 %v544
        %751 = vmatmul.mubr.bf16.gmra.mrb[0].mxu0 %v543
        %v752 = vpop.f32.mrb[0].mxu0
        %v753 = vadd.f32 %v588, %v752
        %v754 = vpop.f32.mrb[0].mxu0
        %v755 = vpop.f32.mrb[0].mxu0
        %v756 = vadd.f32 %v588, %v755
        %v757 = vpop.f32.mrb[0].mxu0
        %758 = vmatprep.mubr.bf16.mxu0 %v546
        %759 = vmatmul.mubr.bf16.gmra.mrb[0].mxu0 %v545
        %v760 = vpop.f32.mrb[0].mxu0
        %v761 = vadd.f32 %v588, %v760
        %v762 = vpop.f32.mrb[0].mxu0
        %v763 = vpop.f32.mrb[0].mxu0
        %v764 = vadd.f32 %v588, %v763
        %v765 = vpop.f32.mrb[0].mxu0
        %766 = vmatprep.mubr.bf16.mxu0 %v548
        %767 = vmatmul.mubr.bf16.gmra.mrb[0].mxu0 %v547
        %v768 = vpop.f32.mrb[0].mxu0
        %v769 = vadd.f32 %v588, %v768
        %v770 = vpop.f32.mrb[0].mxu0
        %v771 = vpop.f32.mrb[0].mxu0
        %v772 = vadd.f32 %v588, %v771
        %v773 = vpop.f32.mrb[0].mxu0
        %774 = vmatprep.mubr.bf16.mxu0 %v550
        %775 = vmatmul.mubr.bf16.gmra.mrb[0].mxu0 %v549
        %v776 = vpop.f32.mrb[0].mxu0
        %v777 = vadd.f32 %v588, %v776
        %v778 = vpop.f32.mrb[0].mxu0
        %v779 = vpop.f32.mrb[0].mxu0
        %v780 = vadd.f32 %v588, %v779
        %v781 = vpop.f32.mrb[0].mxu0
        %782 = vdwg.mxu0
        %v783 = vmax.f32 %v721, 0.0
        %v784 = vmax.f32 %v724, 0.0
        %v785 = vmax.f32 %v729, 0.0
        %v786 = vmax.f32 %v732, 0.0
        %v787 = vmax.f32 %v737, 0.0
        %v788 = vmax.f32 %v740, 0.0
        %v789 = vmax.f32 %v745, 0.0
        %v790 = vmax.f32 %v748, 0.0
        %v791 = vmax.f32 %v753, 0.0
        %v792 = vmax.f32 %v756, 0.0
        %v793 = vmax.f32 %v761, 0.0
        %v794 = vmax.f32 %v764, 0.0
        %v795 = vmax.f32 %v769, 0.0
        %v796 = vmax.f32 %v772, 0.0
        %v797 = vmax.f32 %v777, 0.0
        %v798 = vmax.f32 %v780, 0.0
        %v799 = vpack.c.bf16 %v784, %v783
        %v800 = vpack.c.bf16 %v786, %v785
        %v801 = vpack.c.bf16 %v788, %v787
        %v802 = vpack.c.bf16 %v790, %v789
        %v803 = vpack.c.bf16 %v792, %v791
        %v804 = vpack.c.bf16 %v794, %v793
        %v805 = vpack.c.bf16 %v796, %v795
        %v806 = vpack.c.bf16 %v798, %v797
        %v807 = vld [vmem:[%s5] sm:$0xf]
        %v808 = vld [vmem:[%s5 + $0x4] sm:$0xf]
        %v809 = vld [vmem:[%s5 + $0x8] sm:$0xf]
        %v810 = vld [vmem:[%s5 + $0xc] sm:$0xf]
        %v811 = vld [vmem:[%s5 + $0x10] sm:$0xf]
        %v812 = vld [vmem:[%s5 + $0x14] sm:$0xf]
        %v813 = vld [vmem:[%s5 + $0x18] sm:$0xf]
        %v814 = vld [vmem:[%s5 + $0x1c] sm:$0xf]
        %v815 = vld [vmem:[%s5 + $0x20] sm:$0xf]
        %v816 = vld [vmem:[%s5 + $0x24] sm:$0xf]
        %v817 = vld [vmem:[%s5 + $0x28] sm:$0xf]
        %v818 = vld [vmem:[%s5 + $0x2c] sm:$0xf]
        %v819 = vld [vmem:[%s5 + $0x30] sm:$0xf]
        %v820 = vld [vmem:[%s5 + $0x34] sm:$0xf]
        %v821 = vld [vmem:[%s5 + $0x38] sm:$0xf]
        %v822 = vld [vmem:[%s5 + $0x3c] sm:$0xf]
        %v823 = vld [vmem:[%s6] sm:$0x1]
        %v825 = vlaneseq
        %v826 = vshrl.u32 %v825, 7
        %v827 = vsub.s32 0, %v826
        %v828 = vrot.slane %v823, %v827
        %v846 = vunpack.c.l.b16 %v807
        %v847 = vunpack.c.l.b16 %v808
        %v848 = vunpack.c.l.b16 %v809
        %v849 = vunpack.c.l.b16 %v810
        %v850 = vunpack.c.l.b16 %v811
        %v851 = vunpack.c.l.b16 %v812
        %v852 = vunpack.c.l.b16 %v813
        %v853 = vunpack.c.l.b16 %v814
        %v854 = vunpack.c.l.b16 %v815
        %v855 = vunpack.c.l.b16 %v816
        %v856 = vunpack.c.l.b16 %v817
        %v857 = vunpack.c.l.b16 %v818
        %v858 = vunpack.c.l.b16 %v819
        %v859 = vunpack.c.l.b16 %v820
        %v860 = vunpack.c.l.b16 %v821
        %v861 = vunpack.c.l.b16 %v822
        %v862 = vpack.c.b16 %v847, %v846
        %v863 = vpack.c.b16 %v849, %v848
        %v864 = vpack.c.b16 %v851, %v850
        %v865 = vpack.c.b16 %v853, %v852
        %v866 = vpack.c.b16 %v855, %v854
        %v867 = vpack.c.b16 %v857, %v856
        %v868 = vpack.c.b16 %v859, %v858
        %v869 = vpack.c.b16 %v861, %v860
        %878 = vmatprep.subr.bf16.mxu0 0
        %879 = vmatpush1.bf16.msra.mxu0 %v862
        %880 = vmatprep.subr.bf16.mxu0 0
        %881 = vmatpush1.bf16.msra.mxu0 %v863
        %882 = vmatprep.subr.bf16.mxu0 0
        %883 = vmatpush1.bf16.msra.mxu0 %v864
        %884 = vmatprep.subr.bf16.mxu0 0
        %885 = vmatpush1.bf16.msra.mxu0 %v865
        %886 = vmatprep.subr.bf16.mxu0 0
        %887 = vmatpush1.bf16.msra.mxu0 %v866
        %888 = vmatprep.subr.bf16.mxu0 0
        %889 = vmatpush1.bf16.msra.mxu0 %v867
        %890 = vmatprep.subr.bf16.mxu0 0
        %891 = vmatpush1.bf16.msra.mxu0 %v868
        %892 = vmatprep.subr.bf16.mxu0 0
        %893 = vmatpush1.bf16.msra.mxu0 %v869
        %894 = vmatprep.subr.bf16.mxu0 0
        %895 = vmatpush1.bf16.msra.mxu0 0
        %896 = vmatprep.subr.bf16.mxu0 0
        %897 = vmatpush1.bf16.msra.mxu0 0
        %898 = vmatprep.subr.bf16.mxu0 0
        %899 = vmatpush1.bf16.msra.mxu0 0
        %900 = vmatprep.subr.bf16.mxu0 0
        %901 = vmatpush1.bf16.msra.mxu0 0
        %902 = vmatprep.subr.bf16.mxu0 0
        %903 = vmatpush1.bf16.msra.mxu0 0
        %904 = vmatprep.subr.bf16.mxu0 0
        %905 = vmatpush1.bf16.msra.mxu0 0
        %906 = vmatprep.subr.bf16.mxu0 0
        %907 = vmatpush1.bf16.msra.mxu0 0
        %908 = vmatprep.subr.bf16.mxu0 0
        %909 = vmatpush1.bf16.msra.mxu0 0
        %910 = vmatprep.mubr.bf16.mxu0 0
        %911 = vmatmul.mubr.bf16.gmra.mrb[0].mxu0 %v799
        %v912 = vpop.f32.mrb[0].mxu0
        %v913 = vadd.f32 %v828, %v912
        %v914 = vpop.f32.mrb[0].mxu0
        %v915 = vpop.f32.mrb[0].mxu0
        %v916 = vadd.f32 %v828, %v915
        %v917 = vpop.f32.mrb[0].mxu0
        %918 = vmatprep.mubr.bf16.mxu0 0
        %919 = vmatmul.mubr.bf16.gmra.mrb[0].mxu0 %v800
        %v920 = vpop.f32.mrb[0].mxu0
        %v921 = vadd.f32 %v828, %v920
        %v922 = vpop.f32.mrb[0].mxu0
        %v923 = vpop.f32.mrb[0].mxu0
        %v924 = vadd.f32 %v828, %v923
        %v925 = vpop.f32.mrb[0].mxu0
        %926 = vmatprep.mubr.bf16.mxu0 0
        %927 = vmatmul.mubr.bf16.gmra.mrb[0].mxu0 %v801
        %v928 = vpop.f32.mrb[0].mxu0
        %v929 = vadd.f32 %v828, %v928
        %v930 = vpop.f32.mrb[0].mxu0
        %v931 = vpop.f32.mrb[0].mxu0
        %v932 = vadd.f32 %v828, %v931
        %v933 = vpop.f32.mrb[0].mxu0
        %934 = vmatprep.mubr.bf16.mxu0 0
        %935 = vmatmul.mubr.bf16.gmra.mrb[0].mxu0 %v802
        %v936 = vpop.f32.mrb[0].mxu0
        %v937 = vadd.f32 %v828, %v936
        %v938 = vpop.f32.mrb[0].mxu0
        %v939 = vpop.f32.mrb[0].mxu0
        %v940 = vadd.f32 %v828, %v939
        %v941 = vpop.f32.mrb[0].mxu0
        %942 = vmatprep.mubr.bf16.mxu0 0
        %943 = vmatmul.mubr.bf16.gmra.mrb[0].mxu0 %v803
        %v944 = vpop.f32.mrb[0].mxu0
        %v945 = vadd.f32 %v828, %v944
        %v946 = vpop.f32.mrb[0].mxu0
        %v947 = vpop.f32.mrb[0].mxu0
        %v948 = vadd.f32 %v828, %v947
        %v949 = vpop.f32.mrb[0].mxu0
        %950 = vmatprep.mubr.bf16.mxu0 0
        %951 = vmatmul.mubr.bf16.gmra.mrb[0].mxu0 %v804
        %v952 = vpop.f32.mrb[0].mxu0
        %v953 = vadd.f32 %v828, %v952
        %v954 = vpop.f32.mrb[0].mxu0
        %v955 = vpop.f32.mrb[0].mxu0
        %v956 = vadd.f32 %v828, %v955
        %v957 = vpop.f32.mrb[0].mxu0
        %958 = vmatprep.mubr.bf16.mxu0 0
        %959 = vmatmul.mubr.bf16.gmra.mrb[0].mxu0 %v805
        %v960 = vpop.f32.mrb[0].mxu0
        %v961 = vadd.f32 %v828, %v960
        %v962 = vpop.f32.mrb[0].mxu0
        %v963 = vpop.f32.mrb[0].mxu0
        %v964 = vadd.f32 %v828, %v963
        %v965 = vpop.f32.mrb[0].mxu0
        %966 = vmatprep.mubr.bf16.mxu0 0
        %967 = vmatmul.mubr.bf16.gmra.mrb[0].mxu0 %v806
        %v968 = vpop.f32.mrb[0].mxu0
        %v969 = vadd.f32 %v828, %v968
        %v970 = vpop.f32.mrb[0].mxu0
        %v971 = vpop.f32.mrb[0].mxu0
        %v972 = vadd.f32 %v828, %v971
        %v973 = vpop.f32.mrb[0].mxu0
        %974 = vdwg.mxu0
        %975 = vmax.xlane.f32.xlu0 %v913
        %v976 = vpop.xlane.xlu0 %975
        %977 = vmax.xlane.f32.xlu0 %v916
        %v978 = vpop.xlane.xlu0 %977
        %979 = vmax.xlane.f32.xlu0 %v921
        %v980 = vpop.xlane.xlu0 %979
        %981 = vmax.xlane.f32.xlu0 %v924
        %v982 = vpop.xlane.xlu0 %981
        %983 = vmax.xlane.f32.xlu0 %v929
        %v984 = vpop.xlane.xlu0 %983
        %985 = vmax.xlane.f32.xlu0 %v932
        %v986 = vpop.xlane.xlu0 %985
        %987 = vmax.xlane.f32.xlu0 %v937
        %v988 = vpop.xlane.xlu0 %987
        %989 = vmax.xlane.f32.xlu0 %v940
        %v990 = vpop.xlane.xlu0 %989
        %991 = vmax.xlane.f32.xlu0 %v945
        %v992 = vpop.xlane.xlu0 %991
        %993 = vmax.xlane.f32.xlu0 %v948
        %v994 = vpop.xlane.xlu0 %993
        %995 = vmax.xlane.f32.xlu0 %v953
        %v996 = vpop.xlane.xlu0 %995
        %997 = vmax.xlane.f32.xlu0 %v956
        %v998 = vpop.xlane.xlu0 %997
        %999 = vmax.xlane.f32.xlu0 %v961
        %v1000 = vpop.xlane.xlu0 %999
        %1001 = vmax.xlane.f32.xlu0 %v964
        %v1002 = vpop.xlane.xlu0 %1001
        %1003 = vmax.xlane.f32.xlu0 %v969
        %v1004 = vpop.xlane.xlu0 %1003
        %1005 = vmax.xlane.f32.xlu0 %v972
        %v1006 = vpop.xlane.xlu0 %1005
        %v1007 = vsub.f32 %v913, %v976
        %v1008 = vsub.f32 %v916, %v978
        %v1009 = vsub.f32 %v921, %v980
        %v1010 = vsub.f32 %v924, %v982
        %v1011 = vsub.f32 %v929, %v984
        %v1012 = vsub.f32 %v932, %v986
        %v1013 = vsub.f32 %v937, %v988
        %v1014 = vsub.f32 %v940, %v990
        %v1015 = vsub.f32 %v945, %v992
        %v1016 = vsub.f32 %v948, %v994
        %v1017 = vsub.f32 %v953, %v996
        %v1018 = vsub.f32 %v956, %v998
        %v1019 = vsub.f32 %v961, %v1000
        %v1020 = vsub.f32 %v964, %v1002
        %v1021 = vsub.f32 %v969, %v1004
        %v1022 = vsub.f32 %v972, %v1006
        %v1023 = vmul.f32 %v1007, 1.442695
        %v1024 = vpow.pop %v1023
        %v1025 = vmul.f32 %v1008, 1.442695
        %v1026 = vpow.pop %v1025
        %v1027 = vmul.f32 %v1009, 1.442695
        %v1028 = vpow.pop %v1027
        %v1029 = vmul.f32 %v1010, 1.442695
        %v1030 = vpow.pop %v1029
        %v1031 = vmul.f32 %v1011, 1.442695
        %v1032 = vpow.pop %v1031
        %v1033 = vmul.f32 %v1012, 1.442695
        %v1034 = vpow.pop %v1033
        %v1035 = vmul.f32 %v1013, 1.442695
        %v1036 = vpow.pop %v1035
        %v1037 = vmul.f32 %v1014, 1.442695
        %v1038 = vpow.pop %v1037
        %v1039 = vmul.f32 %v1015, 1.442695
        %v1040 = vpow.pop %v1039
        %v1041 = vmul.f32 %v1016, 1.442695
        %v1042 = vpow.pop %v1041
        %v1043 = vmul.f32 %v1017, 1.442695
        %v1044 = vpow.pop %v1043
        %v1045 = vmul.f32 %v1018, 1.442695
        %v1046 = vpow.pop %v1045
        %v1047 = vmul.f32 %v1019, 1.442695
        %v1048 = vpow.pop %v1047
        %v1049 = vmul.f32 %v1020, 1.442695
        %v1050 = vpow.pop %v1049
        %v1051 = vmul.f32 %v1021, 1.442695
        %v1052 = vpow.pop %v1051
        %v1053 = vmul.f32 %v1022, 1.442695
        %v1054 = vpow.pop %v1053
        %1055 = vadd.xlane.f32.xlu0 %v1024
        %v1056 = vpop.xlane.xlu0 %1055
        %1057 = vadd.xlane.f32.xlu0 %v1026
        %v1058 = vpop.xlane.xlu0 %1057
        %1059 = vadd.xlane.f32.xlu0 %v1028
        %v1060 = vpop.xlane.xlu0 %1059
        %1061 = vadd.xlane.f32.xlu0 %v1030
        %v1062 = vpop.xlane.xlu0 %1061
        %1063 = vadd.xlane.f32.xlu0 %v1032
        %v1064 = vpop.xlane.xlu0 %1063
        %1065 = vadd.xlane.f32.xlu0 %v1034
        %v1066 = vpop.xlane.xlu0 %1065
        %1067 = vadd.xlane.f32.xlu0 %v1036
        %v1068 = vpop.xlane.xlu0 %1067
        %1069 = vadd.xlane.f32.xlu0 %v1038
        %v1070 = vpop.xlane.xlu0 %1069
        %1071 = vadd.xlane.f32.xlu0 %v1040
        %v1072 = vpop.xlane.xlu0 %1071
        %1073 = vadd.xlane.f32.xlu0 %v1042
        %v1074 = vpop.xlane.xlu0 %1073
        %1075 = vadd.xlane.f32.xlu0 %v1044
        %v1076 = vpop.xlane.xlu0 %1075
        %1077 = vadd.xlane.f32.xlu0 %v1046
        %v1078 = vpop.xlane.xlu0 %1077
        %1079 = vadd.xlane.f32.xlu0 %v1048
        %v1080 = vpop.xlane.xlu0 %1079
        %1081 = vadd.xlane.f32.xlu0 %v1050
        %v1082 = vpop.xlane.xlu0 %1081
        %1083 = vadd.xlane.f32.xlu0 %v1052
        %v1084 = vpop.xlane.xlu0 %1083
        %1085 = vadd.xlane.f32.xlu0 %v1054
        %v1086 = vpop.xlane.xlu0 %1085
        %v1087 = vlog2.pop %v1056
        %v1088 = vmul.f32 %v1087, 0.6931472
        %v1089 = vlog2.pop %v1058
        %v1090 = vmul.f32 %v1089, 0.6931472
        %v1091 = vlog2.pop %v1060
        %v1092 = vmul.f32 %v1091, 0.6931472
        %v1093 = vlog2.pop %v1062
        %v1094 = vmul.f32 %v1093, 0.6931472
        %v1095 = vlog2.pop %v1064
        %v1096 = vmul.f32 %v1095, 0.6931472
        %v1097 = vlog2.pop %v1066
        %v1098 = vmul.f32 %v1097, 0.6931472
        %v1099 = vlog2.pop %v1068
        %v1100 = vmul.f32 %v1099, 0.6931472
        %v1101 = vlog2.pop %v1070
        %v1102 = vmul.f32 %v1101, 0.6931472
        %v1103 = vlog2.pop %v1072
        %v1104 = vmul.f32 %v1103, 0.6931472
        %v1105 = vlog2.pop %v1074
        %v1106 = vmul.f32 %v1105, 0.6931472
        %v1107 = vlog2.pop %v1076
        %v1108 = vmul.f32 %v1107, 0.6931472
        %v1109 = vlog2.pop %v1078
        %v1110 = vmul.f32 %v1109, 0.6931472
        %v1111 = vlog2.pop %v1080
        %v1112 = vmul.f32 %v1111, 0.6931472
        %v1113 = vlog2.pop %v1082
        %v1114 = vmul.f32 %v1113, 0.6931472
        %v1115 = vlog2.pop %v1084
        %v1116 = vmul.f32 %v1115, 0.6931472
        %v1117 = vlog2.pop %v1086
        %v1118 = vmul.f32 %v1117, 0.6931472
        %v1119 = vsub.f32 %v1007, %v1088
        %v1120 = vsub.f32 %v1008, %v1090
        %v1121 = vsub.f32 %v1009, %v1092
        %v1122 = vsub.f32 %v1010, %v1094
        %v1123 = vsub.f32 %v1011, %v1096
        %v1124 = vsub.f32 %v1012, %v1098
        %v1125 = vsub.f32 %v1013, %v1100
        %v1126 = vsub.f32 %v1014, %v1102
        %v1127 = vsub.f32 %v1015, %v1104
        %v1128 = vsub.f32 %v1016, %v1106
        %v1129 = vsub.f32 %v1017, %v1108
        %v1130 = vsub.f32 %v1018, %v1110
        %v1131 = vsub.f32 %v1019, %v1112
        %v1132 = vsub.f32 %v1020, %v1114
        %v1133 = vsub.f32 %v1021, %v1116
        %v1134 = vsub.f32 %v1022, %v1118
        %v1135 = vpack.c.bf16 %v1120, %v1119
        %v1136 = vpack.c.bf16 %v1122, %v1121
        %v1137 = vpack.c.bf16 %v1124, %v1123
        %v1138 = vpack.c.bf16 %v1126, %v1125
        %v1139 = vpack.c.bf16 %v1128, %v1127
        %v1140 = vpack.c.bf16 %v1130, %v1129
        %v1141 = vpack.c.bf16 %v1132, %v1131
        %v1142 = vpack.c.bf16 %v1134, %v1133
        %v1151 = vunpack.c.l.b16 %v1135
        %v1152 = vunpack.c.h.b16 %v1135
        %v1153 = vunpack.c.l.b16 %v1136
        %v1154 = vunpack.c.h.b16 %v1136
        %v1155 = vunpack.c.l.b16 %v1137
        %v1156 = vunpack.c.h.b16 %v1137
        %v1157 = vunpack.c.l.b16 %v1138
        %v1158 = vunpack.c.h.b16 %v1138
        %v1159 = vunpack.c.l.b16 %v1139
        %v1160 = vunpack.c.h.b16 %v1139
        %v1161 = vunpack.c.l.b16 %v1140
        %v1162 = vunpack.c.h.b16 %v1140
        %v1163 = vunpack.c.l.b16 %v1141
        %v1164 = vunpack.c.h.b16 %v1141
        %v1165 = vunpack.c.l.b16 %v1142
        %v1166 = vunpack.c.h.b16 %v1142
        %v1167 = vpack.c.b16 %v1151, %v1151
        %v1168 = vpack.c.b16 %v1152, %v1152
        %v1169 = vpack.c.b16 %v1153, %v1153
        %v1170 = vpack.c.b16 %v1154, %v1154
        %v1171 = vpack.c.b16 %v1155, %v1155
        %v1172 = vpack.c.b16 %v1156, %v1156
        %v1173 = vpack.c.b16 %v1157, %v1157
        %v1174 = vpack.c.b16 %v1158, %v1158
        %v1175 = vpack.c.b16 %v1159, %v1159
        %v1176 = vpack.c.b16 %v1160, %v1160
        %v1177 = vpack.c.b16 %v1161, %v1161
        %v1178 = vpack.c.b16 %v1162, %v1162
        %v1179 = vpack.c.b16 %v1163, %v1163
        %v1180 = vpack.c.b16 %v1164, %v1164
        %v1181 = vpack.c.b16 %v1165, %v1165
        %v1182 = vpack.c.b16 %v1166, %v1166
        %1199 = vst [vmem:[%s272] sm:$0xf] %v1167
        %1200 = vst [vmem:[%s272 + $0x4] sm:$0xf] %v1168
        %1201 = vst [vmem:[%s272 + $0x8] sm:$0xf] %v1169
        %1202 = vst [vmem:[%s272 + $0xc] sm:$0xf] %v1170
        %1203 = vst [vmem:[%s272 + $0x10] sm:$0xf] %v1171
        %1204 = vst [vmem:[%s272 + $0x14] sm:$0xf] %v1172
        %1205 = vst [vmem:[%s272 + $0x18] sm:$0xf] %v1173
        %1206 = vst [vmem:[%s272 + $0x1c] sm:$0xf] %v1174
        %1207 = vst [vmem:[%s272 + $0x20] sm:$0xf] %v1175
        %1208 = vst [vmem:[%s272 + $0x24] sm:$0xf] %v1176
        %1209 = vst [vmem:[%s272 + $0x28] sm:$0xf] %v1177
        %1210 = vst [vmem:[%s272 + $0x2c] sm:$0xf] %v1178
        %1211 = vst [vmem:[%s272 + $0x30] sm:$0xf] %v1179
        %1212 = vst [vmem:[%s272 + $0x34] sm:$0xf] %v1180
        %1213 = vst [vmem:[%s272 + $0x38] sm:$0xf] %v1181
        %1214 = vst [vmem:[%s272 + $0x3c] sm:$0xf] %v1182
        %s1215 = sand.u32 %s181, 1
        %s1216 = scalar_lea.sflag [#allocation3], %s1215
        %s1217 = sand.u32 %s181, 1
        %s1218 = smul.addr %s1217, 64
        %s1219 = scalar_lea.vmem [#allocation2], %s1218
        // Predicated region
        $region49: #{mlp4_forward_padded.1} parent=47 // pred_check
          %p1220 = pneg %p191
        $region50: #{mlp4_forward_padded.1} parent=47 // pred_check_branch
          %1222 = sbr.rel (%p1220) target = $region52
        $region51: #{mlp4_forward_padded.1} parent=47 // pred_region
          %s1223 = smul.u32 16, %s21
          %s1225 = ssub.s32 1024, 1024
          %1226 = vsyncadd %s1216, %s1225
          %s1227 = smul.addr %s1223, 64
          %s1228 = scalar_lea.hbm %s7, %s1227
          %s1229 = sshll.u32 %s1219, 4
          %s1230 = int_to_ptr.vmem [resolvable:$true] %s1229
          %1235 = dma.vmem_to_hbm [thread:$0]  %s1230, 1024, %s1228, %s1216, 64, 64, 4
        $region52: #{mlp4_forward_padded.1} parent=47 // pred_fallthru
          _
      $region48: #{mlp4_forward_padded.1} parent=5 // pred_fallthru
        _
      %p1236 = scmp.le.s32.totalorder 2, %s16
      // Predicated region
      $region53: #{mlp4_forward_padded.1} parent=5 // pred_check
        %p1237 = pneg %p1236
      $region54: #{mlp4_forward_padded.1} parent=5 // pred_check_branch
        %1239 = sbr.rel (%p1237) target = $region56
      $region55: #{mlp4_forward_padded.1} parent=5 // pred_region
        %s1240 = ssub.s32 %s16, 2
        // Predicated region
        $region57: #{mlp4_forward_padded.1} parent=55 // pred_check
          %p1241 = pneg %p197
        $region58: #{mlp4_forward_padded.1} parent=55 // pred_check_branch
          %1243 = sbr.rel (%p1241) target = $region60
        $region59: #{mlp4_forward_padded.1} parent=55 // pred_region
          %s1244 = sand.u32 %s182, 1
          %s1245 = scalar_lea.sflag [#allocation3], %s1244
          %s1246 = sand.u32 %s182, 1
          %s1247 = smul.addr %s1246, 64
          %s1248 = scalar_lea.vmem [#allocation2], %s1247
          %1249 = dma.done %s1245, 1024
        $region60: #{mlp4_forward_padded.1} parent=55 // pred_fallthru
          _
      $region56: #{mlp4_forward_padded.1} parent=5 // pred_fallthru
        _
    $region6: #{mlp4_forward_padded.1} parent=1 // loop_footer
      %s20 = sadd.s32 1, %s16
    $region7: #{mlp4_forward_padded.1} parent=1 // loop_footer_branch
      %15 = sbr.rel target = $region3
    $region8: #{mlp4_forward_padded.1} parent=1 // loop_exit
      _
    %1250 = vsyncpa [#allocation3], 1
    %s1251 = scalar_lea.sflag [#allocation3], 1
    %1252 = vsyncpa %s1251, 1

</llo_original>
